<compile_context>
chip_gen: v7x
topology: tpu7x:2x2x1
jax: 0.10.0
libtpu: 0.0.40
codegen_flags: <defaults>
</compile_context>

<pallas_src>
import functools

import jax
import jax.numpy as jnp
from jax import lax
from jax.experimental import pallas as pl
from jax.experimental.pallas import tpu as pltpu

_LANES = 128
_SUBLANES = 8


def _ncc_partial_kernel(c_ref, x1_ref, x2_ref, out_ref, *,
                        block_rows, chunk_rows, last_block_rows):
    """Per-block partial sums for the NCC statistics.

    For this (block_rows, 128) tile of both inputs, writes the five
    lane/sublane-parallel partial sums
        [sum(y1), sum(y2), sum(y1*y2), sum(y1*y1), sum(y2*y2)]
    (y = x - c, c = wrapper-supplied shift held in SMEM) as five (8, 128)
    f32 vregs into out_ref[0, 0:5].  Blocks are fully independent (no carried
    state), so the grid axis is 'parallel'.
    """
    c1 = c_ref[0]
    c2 = c_ref[1]

    def fold(v):
        # (chunk, 128) -> (8, 128) by summing sublane groups: pure elementwise
        # vreg adds, no cross-lane XLU work (deferred to the wrapper).
        return v.reshape(-1, _SUBLANES, _LANES).sum(axis=0)

    def chunk_update(accs, x1c, x2c, mask=None):
        a1, a2, a12, a11, a22 = accs
        y1 = x1c.astype(jnp.float32) - c1
        y2 = x2c.astype(jnp.float32) - c2
        if mask is not None:            # only traced for the one ragged chunk
            y1 = jnp.where(mask, y1, 0.0)
            y2 = jnp.where(mask, y2, 0.0)
        return (a1 + fold(y1),
                a2 + fold(y2),
                a12 + fold(y1 * y2),
                a11 + fold(y1 * y1),
                a22 + fold(y2 * y2))

    def run_and_store(n_rows):
        # n_rows is a static Python int (<= block_rows); block_rows is a
        # static multiple of chunk_rows, so every window below stays inside
        # the VMEM block buffer.
        zero = jnp.zeros((_SUBLANES, _LANES), jnp.float32)
        accs = (zero, zero, zero, zero, zero)
        n_full = n_rows // chunk_rows

        if n_full > 0:
            def body(j, accs):
                idx = pl.multiple_of(j * chunk_rows, chunk_rows)
                return chunk_update(accs,
                                    x1_ref[pl.ds(idx, chunk_rows), :],
                                    x2_ref[pl.ds(idx, chunk_rows), :])
            accs = lax.fori_loop(0, n_full, body, accs)

        rem = n_rows - n_full * chunk_rows
        if rem > 0:
            # At most ONE masked chunk in the entire kernel run (final block
            # only); rows >= rem of this window hold partial-DMA garbage.
            start = n_full * chunk_rows
            rows = lax.broadcasted_iota(jnp.int32, (chunk_rows, _LANES), 0)
            accs = chunk_update(accs,
                                x1_ref[pl.ds(start, chunk_rows), :],
                                x2_ref[pl.ds(start, chunk_rows), :],
                                mask=rows < rem)

        for q, a in enumerate(accs):
            out_ref[0, q] = a

    if last_block_rows == block_rows:
        # No ragged block anywhere: single unmasked hot path.
        run_and_store(block_rows)
    else:
        last = pl.num_programs(0) - 1
        i = pl.program_id(0)

        @pl.when(i < last)
        def _():
            run_and_store(block_rows)

        @pl.when(i == last)
        def _():
            run_and_store(last_block_rows)


def ncc_loss(reconstruction, target, *, e=1e-6,
             target_block_bytes=2 * 1024 * 1024, chunk_rows=64):
    """Pallas implementation of NCCLoss.forward: returns -ncc(recon, target)."""
    assert reconstruction.shape == target.shape, "Inputs are not of equal shape"
    n = reconstruction.size
    assert n > 1

    x1 = jnp.ravel(reconstruction)   # free view for contiguous inputs
    x2 = jnp.ravel(target)

    # Shift for the second-order sums (conditioning only -- the statistics are
    # exactly shift-invariant): cheap subsample mean computed once here and
    # broadcast to every block through SMEM.
    sub = min(n, 8192)
    c1 = jnp.mean(x1[:sub].astype(jnp.float32))
    c2 = jnp.mean(x2[:sub].astype(jnp.float32))
    shift = jnp.stack([c1, c2])

    rows_total = n // _LANES
    n_kernel = rows_total * _LANES
    tail_len = n - n_kernel            # 0..127 elements -> wrapper correction

    if rows_total > 0:
        itemsize = jnp.dtype(x1.dtype).itemsize
        cr = chunk_rows
        if rows_total < cr:
            cr = ((rows_total + _SUBLANES - 1) // _SUBLANES) * _SUBLANES
        # Dtype-scaled block: ~target_block_bytes of input bytes per step
        # (4096 rows for f32, 8192 for bf16), rounded to the chunk size.
        # 2 inputs x 2 pipeline buffers x 2 MiB = 8 MiB VMEM.
        br_target = max(cr, (target_block_bytes // (_LANES * itemsize)) // cr * cr)
        br = min(br_target, max(cr, (rows_total // cr) * cr))
        num_blocks = pl.cdiv(rows_total, br)
        last_rows = rows_total - (num_blocks - 1) * br

        # TODO(synk): when n % 128 != 0 the prefix slice below may materialize
        # an HBM copy (XLA cannot alias a slice into a custom-call operand); a
        # 1-D (br*128,) BlockSpec with an in-kernel flat-index mask on the
        # final block would make that case zero-copy as well.
        x1k = x1[:n_kernel].reshape(rows_total, _LANES)
        x2k = x2[:n_kernel].reshape(rows_total, _LANES)

        kernel = functools.partial(
            _ncc_partial_kernel, block_rows=br, chunk_rows=cr,
            last_block_rows=last_rows)

        # TODO(synk): if a bundle dump shows VALU as the binding slot on v7x
        # (bf16 inputs), offload the sublane fold to the idle MXU with a
        # ones(8, chunk) contraction.
        partials = pl.pallas_call(
            kernel,
            out_shape=jax.ShapeDtypeStruct(
                (num_blocks, 5, _SUBLANES, _LANES), jnp.float32),
            grid_spec=pltpu.PrefetchScalarGridSpec(
                num_scalar_prefetch=0,
                grid=(num_blocks,),
                in_specs=[
                    pl.BlockSpec(memory_space=pltpu.MemorySpace.SMEM),
                    pl.BlockSpec((br, _LANES), lambda i: (i, 0)),
                    pl.BlockSpec((br, _LANES), lambda i: (i, 0)),
                ],
                out_specs=pl.BlockSpec((1, 5, _SUBLANES, _LANES),
                                       lambda i: (i, 0, 0, 0)),
            ),
            compiler_params=pltpu.CompilerParams(
                dimension_semantics=("parallel",),
                vmem_limit_bytes=32 * 1024 * 1024),
        )(shift, x1k, x2k)
        sums = jnp.sum(partials, axis=(0, 2, 3))   # (5,) f32
    else:
        sums = jnp.zeros((5,), jnp.float32)

    s1, s2, s12, s11, s22 = sums[0], sums[1], sums[2], sums[3], sums[4]

    if tail_len > 0:
        t1 = x1[n_kernel:].astype(jnp.float32) - c1
        t2 = x2[n_kernel:].astype(jnp.float32) - c2
        s1 = s1 + jnp.sum(t1)
        s2 = s2 + jnp.sum(t2)
        s12 = s12 + jnp.sum(t1 * t2)
        s11 = s11 + jnp.sum(t1 * t1)
        s22 = s22 + jnp.sum(t2 * t2)

    nf = jnp.float32(n)
    m1 = s1 / nf                       # mean of shifted x1 (small)
    m2 = s2 / nf                       # mean of shifted x2 (small)
    # cc = mean((x1 - mean(x1)) * (x2 - mean(x2)))  (shift-invariant)
    cc = s12 / nf - m1 * m2
    # torch.std uses the unbiased (N-1) denominator.  Shift-invariant.
    var1 = (s11 - nf * m1 * m1) / (nf - 1.0)
    var2 = (s22 - nf * m2 * m2) / (nf - 1.0)
    std = jnp.sqrt(jnp.maximum(var1, 0.0)) * jnp.sqrt(jnp.maximum(var2, 0.0))
    return -(cc / (std + jnp.float32(e)))


class NCCLossPallas:
    """Mirror of the PyTorch NCCLoss module (forward only)."""

    def __init__(self, config):
        self.e = config["e"]

    def __call__(self, inputs, target):
        if isinstance(inputs, (list, tuple)):
            reconstruction = inputs[0]  # (reconstruction, mu, log_var)
        else:
            reconstruction = inputs
        return ncc_loss(reconstruction, target, e=self.e)


def _ncc_reference(x1, x2, e):
    x1 = x1.astype(jnp.float32)
    x2 = x2.astype(jnp.float32)
    cc = jnp.mean((x1 - jnp.mean(x1)) * (x2 - jnp.mean(x2)))
    std = jnp.std(x1, ddof=1) * jnp.std(x2, ddof=1)
    return -(cc / (std + e))


if __name__ == "__main__":
    key = jax.random.PRNGKey(0)
    k1, k2 = jax.random.split(key)

    # Small NCHW shapes consistent with a reconstruction / target pair.
    shape = (2, 4, 16, 16)
    reconstruction = jax.random.normal(k1, shape, dtype=jnp.float32)
    target = 0.7 * reconstruction + 0.3 * jax.random.normal(k2, shape, dtype=jnp.float32)

    loss_fn = NCCLossPallas({"e": 1e-6})
    # Also exercise the list-input path ([reconstruction, mu, log_var]).
    mu = jnp.zeros((2, 8), jnp.float32)
    log_var = jnp.zeros((2, 8), jnp.float32)

    loss = loss_fn([reconstruction, mu, log_var], target)
    loss = jax.block_until_ready(loss)

    ref = _ncc_reference(reconstruction, target, 1e-6)
    assert jnp.allclose(loss, ref, rtol=1e-5, atol=1e-5), (loss, ref)

    print("KERNEL_OK")
</pallas_src>

<mosaic_0001>
module attributes {stable_mosaic.version = 11 : i64} {
  func.func @_ncc_partial_kernel(%arg0: i32, %arg1: memref<2xf32, #tpu.memory_space<smem>>, %arg2: memref<16x128xf32, #tpu.memory_space<vmem>>, %arg3: memref<16x128xf32, #tpu.memory_space<vmem>>, %arg4: memref<1x5x8x128xf32, #tpu.memory_space<vmem>>) attributes {dimension_semantics = [#tpu.dimension_semantics<parallel>], iteration_bounds = array<i64: 1>, scalar_prefetch = 0 : i64, scratch_operands = 0 : i64, tpu.core_type = #tpu.core_type<tc>, window_params = [{transform_indices = @transform_0, window_bounds = array<i64: 2>}, {transform_indices = @transform_1, window_bounds = array<i64: 16, 128>}, {transform_indices = @transform_2, window_bounds = array<i64: 16, 128>}, {transform_indices = @transform_3, window_bounds = array<i64: 1, 5, 8, 128>}]} {
    %c0 = arith.constant 0 : index
    %0 = memref.load %arg1[%c0] : memref<2xf32, #tpu.memory_space<smem>>
    %c1 = arith.constant 1 : index
    %1 = memref.load %arg1[%c1] : memref<2xf32, #tpu.memory_space<smem>>
    %cst = arith.constant 0.000000e+00 : f32
    %2 = vector.broadcast %cst : f32 to vector<8x128xf32>
    %c0_i32 = arith.constant 0 : i32
    %c16_i32 = arith.constant 16 : i32
    %3 = arith.muli %c0_i32, %c16_i32 : i32
    %4 = tpu.assume_multiple %3, 16 : i32
    %5 = arith.index_cast %4 : i32 to index
    %c0_0 = arith.constant 0 : index
    %6 = vector.load %arg2[%5, %c0_0] : memref<16x128xf32, #tpu.memory_space<vmem>>, vector<16x128xf32>
    %7 = arith.index_cast %4 : i32 to index
    %c0_1 = arith.constant 0 : index
    %8 = vector.load %arg3[%7, %c0_1] : memref<16x128xf32, #tpu.memory_space<vmem>>, vector<16x128xf32>
    %9 = vector.broadcast %0 : f32 to vector<16x128xf32>
    %10 = arith.subf %6, %9 : vector<16x128xf32>
    %11 = vector.broadcast %1 : f32 to vector<16x128xf32>
    %12 = arith.subf %8, %11 : vector<16x128xf32>
    %13 = vector.shape_cast %10 : vector<16x128xf32> to vector<2x8x128xf32>
    %cst_2 = arith.constant dense<0.000000e+00> : vector<8x128xf32>
    %14 = vector.multi_reduction <add>, %13, %cst_2 [0] : vector<2x8x128xf32> to vector<8x128xf32>
    %15 = arith.addf %2, %14 : vector<8x128xf32>
    %16 = vector.shape_cast %12 : vector<16x128xf32> to vector<2x8x128xf32>
    %cst_3 = arith.constant dense<0.000000e+00> : vector<8x128xf32>
    %17 = vector.multi_reduction <add>, %16, %cst_3 [0] : vector<2x8x128xf32> to vector<8x128xf32>
    %18 = arith.addf %2, %17 : vector<8x128xf32>
    %19 = arith.mulf %10, %12 : vector<16x128xf32>
    %20 = vector.shape_cast %19 : vector<16x128xf32> to vector<2x8x128xf32>
    %cst_4 = arith.constant dense<0.000000e+00> : vector<8x128xf32>
    %21 = vector.multi_reduction <add>, %20, %cst_4 [0] : vector<2x8x128xf32> to vector<8x128xf32>
    %22 = arith.addf %2, %21 : vector<8x128xf32>
    %23 = arith.mulf %10, %10 : vector<16x128xf32>
    %24 = vector.shape_cast %23 : vector<16x128xf32> to vector<2x8x128xf32>
    %cst_5 = arith.constant dense<0.000000e+00> : vector<8x128xf32>
    %25 = vector.multi_reduction <add>, %24, %cst_5 [0] : vector<2x8x128xf32> to vector<8x128xf32>
    %26 = arith.addf %2, %25 : vector<8x128xf32>
    %27 = arith.mulf %12, %12 : vector<16x128xf32>
    %28 = vector.shape_cast %27 : vector<16x128xf32> to vector<2x8x128xf32>
    %cst_6 = arith.constant dense<0.000000e+00> : vector<8x128xf32>
    %29 = vector.multi_reduction <add>, %28, %cst_6 [0] : vector<2x8x128xf32> to vector<8x128xf32>
    %30 = arith.addf %2, %29 : vector<8x128xf32>
    %c1_i32 = arith.constant 1 : i32
    %c0_7 = arith.constant 0 : index
    %c0_8 = arith.constant 0 : index
    %c0_9 = arith.constant 0 : index
    %c0_10 = arith.constant 0 : index
    %31 = vector.load %arg4[%c0_7, %c0_8, %c0_9, %c0_10] : memref<1x5x8x128xf32, #tpu.memory_space<vmem>>, vector<1x1x8x128xf32>
    %32 = vector.shape_cast %31 : vector<1x1x8x128xf32> to vector<8x128xf32>
    %33 = vector.shape_cast %15 : vector<8x128xf32> to vector<1x1x8x128xf32>
    tpu.vector_store %arg4[%c0_7, %c0_8, %c0_9, %c0_10], %33 {strides = array<i32>} : memref<1x5x8x128xf32, #tpu.memory_space<vmem>>, vector<1x1x8x128xf32>,
    %c0_11 = arith.constant 0 : index
    %c1_12 = arith.constant 1 : index
    %c0_13 = arith.constant 0 : index
    %c0_14 = arith.constant 0 : index
    %34 = vector.load %arg4[%c0_11, %c1_12, %c0_13, %c0_14] : memref<1x5x8x128xf32, #tpu.memory_space<vmem>>, vector<1x1x8x128xf32>
    %35 = vector.shape_cast %34 : vector<1x1x8x128xf32> to vector<8x128xf32>
    %36 = vector.shape_cast %18 : vector<8x128xf32> to vector<1x1x8x128xf32>
    tpu.vector_store %arg4[%c0_11, %c1_12, %c0_13, %c0_14], %36 {strides = array<i32>} : memref<1x5x8x128xf32, #tpu.memory_space<vmem>>, vector<1x1x8x128xf32>,
    %c0_15 = arith.constant 0 : index
    %c2 = arith.constant 2 : index
    %c0_16 = arith.constant 0 : index
    %c0_17 = arith.constant 0 : index
    %37 = vector.load %arg4[%c0_15, %c2, %c0_16, %c0_17] : memref<1x5x8x128xf32, #tpu.memory_space<vmem>>, vector<1x1x8x128xf32>
    %38 = vector.shape_cast %37 : vector<1x1x8x128xf32> to vector<8x128xf32>
    %39 = vector.shape_cast %22 : vector<8x128xf32> to vector<1x1x8x128xf32>
    tpu.vector_store %arg4[%c0_15, %c2, %c0_16, %c0_17], %39 {strides = array<i32>} : memref<1x5x8x128xf32, #tpu.memory_space<vmem>>, vector<1x1x8x128xf32>,
    %c0_18 = arith.constant 0 : index
    %c3 = arith.constant 3 : index
    %c0_19 = arith.constant 0 : index
    %c0_20 = arith.constant 0 : index
    %40 = vector.load %arg4[%c0_18, %c3, %c0_19, %c0_20] : memref<1x5x8x128xf32, #tpu.memory_space<vmem>>, vector<1x1x8x128xf32>
    %41 = vector.shape_cast %40 : vector<1x1x8x128xf32> to vector<8x128xf32>
    %42 = vector.shape_cast %26 : vector<8x128xf32> to vector<1x1x8x128xf32>
    tpu.vector_store %arg4[%c0_18, %c3, %c0_19, %c0_20], %42 {strides = array<i32>} : memref<1x5x8x128xf32, #tpu.memory_space<vmem>>, vector<1x1x8x128xf32>,
    %c0_21 = arith.constant 0 : index
    %c4 = arith.constant 4 : index
    %c0_22 = arith.constant 0 : index
    %c0_23 = arith.constant 0 : index
    %43 = vector.load %arg4[%c0_21, %c4, %c0_22, %c0_23] : memref<1x5x8x128xf32, #tpu.memory_space<vmem>>, vector<1x1x8x128xf32>
    %44 = vector.shape_cast %43 : vector<1x1x8x128xf32> to vector<8x128xf32>
    %45 = vector.shape_cast %30 : vector<8x128xf32> to vector<1x1x8x128xf32>
    tpu.vector_store %arg4[%c0_21, %c4, %c0_22, %c0_23], %45 {strides = array<i32>} : memref<1x5x8x128xf32, #tpu.memory_space<vmem>>, vector<1x1x8x128xf32>,
    return
  }
  func.func @transform_0(%arg0: i32) -> i32 {
    %c0_i32 = arith.constant 0 : i32
    %c0_i32_0 = arith.constant 0 : i32
    return %c0_i32 : i32
  }
  func.func @transform_1(%arg0: i32) -> (i32, i32) {
    %c0_i32 = arith.constant 0 : i32
    %c0_i32_0 = arith.constant 0 : i32
    return %arg0, %c0_i32 : i32, i32
  }
  func.func @transform_2(%arg0: i32) -> (i32, i32) {
    %c0_i32 = arith.constant 0 : i32
    %c0_i32_0 = arith.constant 0 : i32
    return %arg0, %c0_i32 : i32, i32
  }
  func.func @transform_3(%arg0: i32) -> (i32, i32, i32, i32) {
    %c0_i32 = arith.constant 0 : i32
    %c0_i32_0 = arith.constant 0 : i32
    %c0_i32_1 = arith.constant 0 : i32
    %c0_i32_2 = arith.constant 0 : i32
    return %arg0, %c0_i32, %c0_i32_0, %c0_i32_1 : i32, i32, i32, i32
  }
}

</mosaic_0001>

<llo_original>
// kernel: tpu_custom_call.1
$region0: #{tpu_custom_call.1}
  #allocation0 [shape = 'u32[]', space=smem, size = 0x4, offset = 0x4, fixed_abs, tag = 'smem constant byte address 0x4 - core index']
  #allocation1 [shape = 'u32[144,128]{1,0:T(1,128)}', space=vmem, size = 0x12000, scoped, tag = 'internal scratch']
  %s0 = inlined_call_operand.hbm [shape: f32[2], index: 0, kind: input, shape index: {}]
  %s1 = inlined_call_operand.hbm [shape: f32[16,128], index: 1, kind: input, shape index: {}]
  %s2 = inlined_call_operand.hbm [shape: f32[16,128], index: 2, kind: input, shape index: {}]
  %s3 = inlined_call_operand.hbm [shape: f32[1,5,8,128], index: 3, kind: output, shape index: {}]
  %s4 = sld [smem:[#allocation0]]
  $region34: #{tpu_custom_call.1} parent=0
    _
  %s6 = ssub.s32 1, %s4
  %s7 = scalar_select 0, %s6, %s4
  $region1: #{tpu_custom_call.1} parent=0
    #allocation2 [shape = 'u8[512]{0}', space=smem, size = 0x200, scoped, tag = 'input window, operand 0, single buffered']
    #allocation3 [shape = 's32[1]{0}', space=sflag, size = 0x4, scoped, tag = 'scoped memory for tpu_custom_call.1']
    #allocation4 [shape = 's32[1]{0}', space=sflag, size = 0x4, scoped, tag = 'scoped memory for tpu_custom_call.1']
    #allocation5 [shape = 's32[1]{0}', space=sflag, size = 0x4, scoped, tag = 'scoped memory for tpu_custom_call.1']
    #allocation6 [shape = 'u8[8192]{0}', space=vmem, size = 0x2000, scoped, tag = 'input window, operand 1, single buffered']
    #allocation7 [shape = 'u8[8192]{0}', space=vmem, size = 0x2000, scoped, tag = 'input window, operand 2, single buffered']
    #allocation8 [shape = 's32[1]{0}', space=sflag, size = 0x4, scoped, tag = 'scoped memory for tpu_custom_call.1']
    #allocation9 [shape = 'u8[20480]{0}', space=vmem, size = 0x5000, scoped, tag = 'output window, operand 0, single buffered']
    %8 = vsyncpa [#allocation5], 0
    %9 = vsyncpa [#allocation3], 0
    %10 = vsyncpa [#allocation8], 0
    %11 = vsyncpa [#allocation4], 0
    // Predicated region
    $region2: #{tpu_custom_call.1} parent=1 // pred_check
      _
    $region3: #{tpu_custom_call.1} parent=1 // pred_check_branch
      %13 = sbr.rel (0) target = $region5
    $region4: #{tpu_custom_call.1} parent=1 // pred_region
      %s15 = ssub.s32 16, 16
      %16 = vsyncadd [#allocation5], %s15
      %19 = dma.hbm_to_smem %s0, 16, [#allocation2], [#allocation5]
    $region5: #{tpu_custom_call.1} parent=1 // pred_fallthru
      _
    // Predicated region
    $region6: #{tpu_custom_call.1} parent=1 // pred_check
      _
    $region7: #{tpu_custom_call.1} parent=1 // pred_check_branch
      %21 = sbr.rel (0) target = $region9
    $region8: #{tpu_custom_call.1} parent=1 // pred_region
      %s23 = ssub.s32 256, 256
      %24 = vsyncadd [#allocation3], %s23
      %s25 = sshll.u32 [#allocation6], 4
      %s26 = int_to_ptr.vmem [resolvable:$true] %s25
      %31 = dma.hbm_to_vmem [thread:$0]  %s1, 256, %s26, [#allocation3], 128, 128, 8
    $region9: #{tpu_custom_call.1} parent=1 // pred_fallthru
      _
    // Predicated region
    $region10: #{tpu_custom_call.1} parent=1 // pred_check
      _
    $region11: #{tpu_custom_call.1} parent=1 // pred_check_branch
      %33 = sbr.rel (0) target = $region13
    $region12: #{tpu_custom_call.1} parent=1 // pred_region
      %s35 = ssub.s32 256, 256
      %36 = vsyncadd [#allocation8], %s35
      %s37 = sshll.u32 [#allocation7], 4
      %s38 = int_to_ptr.vmem [resolvable:$true] %s37
      %43 = dma.hbm_to_vmem [thread:$0]  %s2, 256, %s38, [#allocation8], 128, 128, 8
    $region13: #{tpu_custom_call.1} parent=1 // pred_fallthru
      _
    // Predicated region
    $region14: #{tpu_custom_call.1} parent=1 // pred_check
      _
    $region15: #{tpu_custom_call.1} parent=1 // pred_check_branch
      %45 = sbr.rel (0) target = $region17
    $region16: #{tpu_custom_call.1} parent=1 // pred_region
      %46 = dma.done [#allocation5], 16
    $region17: #{tpu_custom_call.1} parent=1 // pred_fallthru
      _
    // Predicated region
    $region18: #{tpu_custom_call.1} parent=1 // pred_check
      _
    $region19: #{tpu_custom_call.1} parent=1 // pred_check_branch
      %48 = sbr.rel (0) target = $region21
    $region20: #{tpu_custom_call.1} parent=1 // pred_region
      %49 = dma.done [#allocation3], 256
    $region21: #{tpu_custom_call.1} parent=1 // pred_fallthru
      _
    // Predicated region
    $region22: #{tpu_custom_call.1} parent=1 // pred_check
      _
    $region23: #{tpu_custom_call.1} parent=1 // pred_check_branch
      %51 = sbr.rel (0) target = $region25
    $region24: #{tpu_custom_call.1} parent=1 // pred_region
      %52 = dma.done [#allocation8], 256
    $region25: #{tpu_custom_call.1} parent=1 // pred_fallthru
      _
    %53 = sfence
    %s54 = sld [smem:[#allocation2]]
    %s55 = sld [smem:[#allocation2 + $0x1]]
    %v56 = vld [vmem:[#allocation6] sm:$0xff]
    %v57 = vld [vmem:[#allocation6 + $0x8] sm:$0xff]
    %v58 = vld [vmem:[#allocation7] sm:$0xff]
    %v59 = vld [vmem:[#allocation7 + $0x8] sm:$0xff]
    %v60 = vstv %s54
    %v61 = vsub.f32 %v56, %v60
    %v62 = vsub.f32 %v57, %v60
    %v63 = vstv %s55
    %v64 = vsub.f32 %v58, %v63
    %v65 = vsub.f32 %v59, %v63
    %v66 = vadd.f32 %v61, %v62
    %v67 = vadd.f32 %v66, 0.0
    %v68 = vadd.f32 %v64, %v65
    %v69 = vadd.f32 %v68, 0.0
    %v70 = vmul.f32 %v61, %v64
    %v71 = vmul.f32 %v62, %v65
    %v72 = vadd.f32 %v70, %v71
    %v73 = vadd.f32 %v72, 0.0
    %v74 = vmul.f32 %v61, %v61
    %v75 = vmul.f32 %v62, %v62
    %v76 = vadd.f32 %v74, %v75
    %v77 = vadd.f32 %v76, 0.0
    %v78 = vmul.f32 %v64, %v64
    %v79 = vmul.f32 %v65, %v65
    %v80 = vadd.f32 %v78, %v79
    %v81 = vadd.f32 %v80, 0.0
    %82 = vst [vmem:[#allocation9] sm:$0xff] %v67
    %s83 = scalar_lea.vmem [#allocation9], 8
    %84 = vst [vmem:[%s83] sm:$0xff] %v69
    %s85 = scalar_lea.vmem [#allocation9], 16
    %86 = vst [vmem:[%s85] sm:$0xff] %v73
    %s87 = scalar_lea.vmem [#allocation9], 24
    %88 = vst [vmem:[%s87] sm:$0xff] %v77
    %s89 = scalar_lea.vmem [#allocation9], 32
    %90 = vst [vmem:[%s89] sm:$0xff] %v81
    // Predicated region
    $region26: #{tpu_custom_call.1} parent=1 // pred_check
      _
    $region27: #{tpu_custom_call.1} parent=1 // pred_check_branch
      %92 = sbr.rel (0) target = $region29
    $region28: #{tpu_custom_call.1} parent=1 // pred_region
      %s94 = ssub.s32 640, 640
      %95 = vsyncadd [#allocation4], %s94
      %s96 = sshll.u32 [#allocation9], 4
      %s97 = int_to_ptr.vmem [resolvable:$true] %s96
      %102 = dma.vmem_to_hbm [thread:$0]  %s97, 640, %s3, [#allocation4], 128, 128, 8
    $region29: #{tpu_custom_call.1} parent=1 // pred_fallthru
      _
    // Predicated region
    $region30: #{tpu_custom_call.1} parent=1 // pred_check
      _
    $region31: #{tpu_custom_call.1} parent=1 // pred_check_branch
      %104 = sbr.rel (0) target = $region33
    $region32: #{tpu_custom_call.1} parent=1 // pred_region
      %105 = dma.done [#allocation4], 640
    $region33: #{tpu_custom_call.1} parent=1 // pred_fallthru
      _
    %106 = vsyncpa [#allocation3], 1
    %107 = vsyncpa [#allocation8], 1
    %108 = vsyncpa [#allocation4], 1
    %109 = vsyncpa [#allocation5], 1

</llo_original>
